<compile_context>
chip_gen: v6e
topology: v6e:2x2x1
jax: 0.10.0
libtpu: 0.0.40
codegen_flags: <defaults>
</compile_context>

<pallas_src>
import jax
import jax.numpy as jnp
from jax.experimental import pallas as pl
from jax.experimental.pallas import tpu as pltpu


def _output_layer_kernel(x_ref, w1_ref, b1_ref, w2_ref, b2_ref, o_ref):
    # x_ref:  (tm, K)   f32 VMEM   flattened (B*N, T*F) block, time-major K
    # w1_ref: (K, H1)   f32 VMEM   fully_1 weight in matmul form
    # b1_ref: (1, H1)   f32 VMEM
    # w2_ref: (1, H1)   f32 VMEM   fully_2 weight as a row vector
    # b2_ref: (1,)      f32 SMEM   fully_2 bias scalar
    # o_ref:  (1, tm)   f32 VMEM   lane-dense output row for this block
    # fully_1: single MXU dot over the full K = T*F contraction.
    h = jnp.dot(x_ref[...], w1_ref[...], preferred_element_type=jnp.float32)
    h = jnp.maximum(h + b1_ref[...], 0.0)                      # (tm, H1) bias + ReLU
    # fully_2 (H1 -> 1): VPU multiply + XLU lane reduction for the whole block.
    y = jnp.sum(h * w2_ref[...], axis=-1) + b2_ref[0]          # (tm,)
    o_ref[...] = y[None, :].astype(o_ref.dtype)                # (1, tm) lane-dense store


def output_layer_forward(data, w1, b1, w2, b2, *, block_m=512):
    """data: (B, T, N, F) f32; w1: (K, H1) with K = T*F time-major;
    b1: (1, H1); w2: (H1, 1); b2: (1, 1).  Returns (B, 1, N)."""
    B, T, N, F = data.shape
    K = T * F
    H1 = w1.shape[-1]
    assert w1.shape == (K, H1)
    M = B * N

    # Flatten to (B*N, K), matching the PyTorch permute(0,2,1,3)+reshape
    # (k = t*F + f, time-major).  Contiguous, lane-dense kernel input.
    x = jnp.transpose(data, (0, 2, 1, 3)).reshape(M, K).astype(jnp.float32)

    # Block over M; block_m=512 is a multiple of (8, 128) so tiles stay legal
    # when the grid is >1.  At toy shapes tm == M and the grid is (1,).
    tm = min(block_m, M)
    m_pad = pl.cdiv(M, tm) * tm
    if m_pad != M:
        x = jnp.pad(x, ((0, m_pad - M), (0, 0)))
    grid_m = m_pad // tm

    w1r = w1.astype(jnp.float32)                 # (K, H1) — natural matmul form
    b1r = b1.reshape(1, H1).astype(jnp.float32)
    w2r = w2.reshape(1, H1).astype(jnp.float32)  # row vector for the VPU reduce
    b2r = b2.reshape(1).astype(jnp.float32)      # 1-D scalar for SMEM

    out_flat = pl.pallas_call(
        _output_layer_kernel,
        out_shape=jax.ShapeDtypeStruct((1, m_pad), jnp.float32),
        grid=(grid_m,),
        in_specs=[
            pl.BlockSpec((tm, K), lambda i: (i, 0)),                     # x block
            pl.BlockSpec((K, H1), lambda i: (0, 0)),                     # w1 (resident)
            pl.BlockSpec((1, H1), lambda i: (0, 0)),                     # b1
            pl.BlockSpec((1, H1), lambda i: (0, 0)),                     # w2 row
            pl.BlockSpec(memory_space=pltpu.MemorySpace.SMEM),           # b2 scalar
        ],
        out_specs=pl.BlockSpec((1, tm), lambda i: (0, i)),               # lane-dense row
        compiler_params=pltpu.CompilerParams(
            dimension_semantics=("parallel",)),
    )(x, w1r, b1r, w2r, b2r)

    # (1, B*N) -> (B, 1, N): free contiguous reshapes on the wrapper side.
    return out_flat[0, :M].reshape(B, 1, N)


def init_params(key, input_length, nhid, hidden=128):
    """Deterministic parameter init.  Conv2d(K, 128, 1, 1) weight (128, K, 1, 1)
    is kept in its transposed matmul form (K, 128); time-major K ordering."""
    K = input_length * nhid
    k1, k2, k3, k4 = jax.random.split(key, 4)
    bound1 = 1.0 / jnp.sqrt(K)
    w1 = jax.random.uniform(k1, (K, hidden), jnp.float32, -bound1, bound1)
    b1 = jax.random.uniform(k2, (1, hidden), jnp.float32, -bound1, bound1)
    bound2 = 1.0 / jnp.sqrt(hidden)
    w2 = jax.random.uniform(k3, (hidden, 1), jnp.float32, -bound2, bound2)
    b2 = jax.random.uniform(k4, (1, 1), jnp.float32, -bound2, bound2)
    return w1, b1, w2, b2


def reference_forward(data, w1, b1, w2, b2):
    """Pure-JAX transliteration of the PyTorch forward (for verification)."""
    B, T, N, F = data.shape
    x = jnp.transpose(data, (0, 2, 1, 3)).reshape(B, N, T * F)   # (B, N, K)
    h = jnp.maximum(jnp.einsum('bnk,kh->bnh', x, w1) + b1[0], 0.0)
    y = jnp.einsum('bnh,ho->bno', h, w2) + b2[0, 0]              # (B, N, 1)
    return jnp.transpose(y, (0, 2, 1))                           # (B, 1, N)


if __name__ == "__main__":
    # Small shapes consistent with the module:
    #   batch=2, input_length (time) = 8, node_num = 16, nhid = 4
    B, T, N, F = 2, 8, 16, 4
    key = jax.random.PRNGKey(0)
    kd, kp = jax.random.split(key)
    data = jax.random.normal(kd, (B, T, N, F), jnp.float32)
    w1, b1, w2, b2 = init_params(kp, input_length=T, nhid=F, hidden=128)

    out = output_layer_forward(data, w1, b1, w2, b2)
    out = jax.block_until_ready(out)

    ref = reference_forward(data, w1, b1, w2, b2)
    assert out.shape == (B, 1, N), out.shape
    assert jnp.allclose(out, ref, atol=1e-5, rtol=1e-5)
    print("KERNEL_OK")
</pallas_src>

<mosaic_0001>
module attributes {stable_mosaic.version = 11 : i64} {
  func.func @_output_layer_kernel(%arg0: i32, %arg1: memref<32x32xf32, #tpu.memory_space<vmem>>, %arg2: memref<32x128xf32, #tpu.memory_space<vmem>>, %arg3: memref<1x128xf32, #tpu.memory_space<vmem>>, %arg4: memref<1x128xf32, #tpu.memory_space<vmem>>, %arg5: memref<1xf32, #tpu.memory_space<smem>>, %arg6: memref<1x32xf32, #tpu.memory_space<vmem>>) attributes {dimension_semantics = [#tpu.dimension_semantics<parallel>], iteration_bounds = array<i64: 1>, scalar_prefetch = 0 : i64, scratch_operands = 0 : i64, tpu.core_type = #tpu.core_type<tc>, window_params = [{transform_indices = @transform_0, window_bounds = array<i64: 32, 32>}, {pipeline_mode = #tpu.pipeline_mode<synchronous>, transform_indices = @transform_1, window_bounds = array<i64: 32, 128>}, {pipeline_mode = #tpu.pipeline_mode<synchronous>, transform_indices = @transform_2, window_bounds = array<i64: 1, 128>}, {pipeline_mode = #tpu.pipeline_mode<synchronous>, transform_indices = @transform_3, window_bounds = array<i64: 1, 128>}, {transform_indices = @transform_4, window_bounds = array<i64: 1>}, {transform_indices = @transform_5, window_bounds = array<i64: 1, 32>}]} {
    %c0 = arith.constant 0 : index
    %c0_0 = arith.constant 0 : index
    %0 = vector.load %arg1[%c0, %c0_0] : memref<32x32xf32, #tpu.memory_space<vmem>>, vector<32x32xf32>
    %c0_1 = arith.constant 0 : index
    %c0_2 = arith.constant 0 : index
    %1 = vector.load %arg2[%c0_1, %c0_2] : memref<32x128xf32, #tpu.memory_space<vmem>>, vector<32x128xf32>
    %cst = arith.constant dense<0.000000e+00> : vector<32x128xf32>
    %2 = tpu.matmul %0, %1, %cst {dimension_numbers = #tpu.dot_dimension_numbers<[1], [0], [0], [1], [0, 0, 1, 1], [], []>} : vector<32x32xf32>, vector<32x128xf32>, vector<32x128xf32> -> vector<32x128xf32>
    %c0_3 = arith.constant 0 : index
    %c0_4 = arith.constant 0 : index
    %3 = vector.load %arg3[%c0_3, %c0_4] : memref<1x128xf32, #tpu.memory_space<vmem>>, vector<1x128xf32>
    %4 = vector.broadcast %3 : vector<1x128xf32> to vector<32x128xf32>
    %5 = arith.addf %2, %4 : vector<32x128xf32>
    %cst_5 = arith.constant 0.000000e+00 : f32
    %6 = vector.broadcast %cst_5 : f32 to vector<32x128xf32>
    %7 = arith.maximumf %5, %6 : vector<32x128xf32>
    %c0_6 = arith.constant 0 : index
    %c0_7 = arith.constant 0 : index
    %8 = vector.load %arg4[%c0_6, %c0_7] : memref<1x128xf32, #tpu.memory_space<vmem>>, vector<1x128xf32>
    %9 = vector.broadcast %8 : vector<1x128xf32> to vector<32x128xf32>
    %10 = arith.mulf %7, %9 : vector<32x128xf32>
    %cst_8 = arith.constant dense<0.000000e+00> : vector<32xf32>
    %11 = vector.multi_reduction <add>, %10, %cst_8 [1] : vector<32x128xf32> to vector<32xf32>
    %c0_9 = arith.constant 0 : index
    %12 = memref.load %arg5[%c0_9] : memref<1xf32, #tpu.memory_space<smem>>
    %13 = vector.broadcast %12 : f32 to vector<32xf32>
    %14 = arith.addf %11, %13 : vector<32xf32>
    %15 = vector.shape_cast %14 : vector<32xf32> to vector<1x32xf32>
    %c0_10 = arith.constant 0 : index
    %c0_11 = arith.constant 0 : index
    %16 = vector.load %arg6[%c0_10, %c0_11] : memref<1x32xf32, #tpu.memory_space<vmem>>, vector<1x32xf32>
    tpu.vector_store %arg6[%c0_10, %c0_11], %15 {strides = array<i32>} : memref<1x32xf32, #tpu.memory_space<vmem>>, vector<1x32xf32>,
    return
  }
  func.func @transform_0(%arg0: i32) -> (i32, i32) {
    %c0_i32 = arith.constant 0 : i32
    %c0_i32_0 = arith.constant 0 : i32
    return %arg0, %c0_i32 : i32, i32
  }
  func.func @transform_1(%arg0: i32) -> (i32, i32) {
    %c0_i32 = arith.constant 0 : i32
    %c0_i32_0 = arith.constant 0 : i32
    %c0_i32_1 = arith.constant 0 : i32
    return %c0_i32, %c0_i32_0 : i32, i32
  }
  func.func @transform_2(%arg0: i32) -> (i32, i32) {
    %c0_i32 = arith.constant 0 : i32
    %c0_i32_0 = arith.constant 0 : i32
    %c0_i32_1 = arith.constant 0 : i32
    return %c0_i32, %c0_i32_0 : i32, i32
  }
  func.func @transform_3(%arg0: i32) -> (i32, i32) {
    %c0_i32 = arith.constant 0 : i32
    %c0_i32_0 = arith.constant 0 : i32
    %c0_i32_1 = arith.constant 0 : i32
    return %c0_i32, %c0_i32_0 : i32, i32
  }
  func.func @transform_4(%arg0: i32) -> i32 {
    %c0_i32 = arith.constant 0 : i32
    %c0_i32_0 = arith.constant 0 : i32
    return %c0_i32 : i32
  }
  func.func @transform_5(%arg0: i32) -> (i32, i32) {
    %c0_i32 = arith.constant 0 : i32
    %c0_i32_0 = arith.constant 0 : i32
    return %c0_i32, %arg0 : i32, i32
  }
}

</mosaic_0001>

<llo_original>
// kernel: tpu_custom_call.1
$region0: #{tpu_custom_call.1}
  #allocation0 [shape = 'u32[]', space=smem, size = 0x4, offset = 0x4, fixed_abs, tag = 'smem constant byte address 0x4 - core index']
  #allocation1 [shape = 'u32[144,128]{1,0:T(1,128)}', space=vmem, size = 0x12000, scoped, tag = 'internal scratch']
  #allocation2 [shape = 'f32[1]{0:T(128)S(6)}', space=smem, size = 0x200, scoped, tag = 'scoped memory for tpu_custom_call.1']
  %s0 = inlined_call_operand.hbm [shape: f32[32,32], index: 0, kind: input, shape index: {}]
  %s1 = inlined_call_operand.hbm [shape: f32[32,128], index: 1, kind: input, shape index: {}]
  %s2 = inlined_call_operand.vmem [shape: f32[1,128], index: 2, kind: input, shape index: {}]
  %s3 = inlined_call_operand.vmem [shape: f32[1,128], index: 3, kind: input, shape index: {}]
  %s4 = inlined_call_operand.<no memory space> [shape: f32[1], index: 4, kind: input, shape index: {}]
  %s5 = inlined_call_operand.hbm [shape: f32[1,32], index: 5, kind: output, shape index: {}]
  %s6 = sld [smem:[#allocation0]]
  $region38: #{tpu_custom_call.1} parent=0
    _
  %s8 = ssub.s32 1, %s6
  %s9 = scalar_select 0, %s8, %s6
  %10 = sst [smem:[#allocation2]] %s4
  $region1: #{tpu_custom_call.1} parent=0
    #allocation3 [shape = 'u8[16384]{0}', space=vmem, size = 0x4000, scoped, tag = 'input window, operand 0, single buffered']
    #allocation4 [shape = 's32[1]{0}', space=sflag, size = 0x4, scoped, tag = 'scoped memory for tpu_custom_call.1']
    #allocation5 [shape = 's32[1]{0}', space=sflag, size = 0x4, scoped, tag = 'scoped memory for tpu_custom_call.1']
    #allocation6 [shape = 'u8[16384]{0}', space=vmem, size = 0x4000, scoped, tag = 'input window, operand 1, single buffered']
    #allocation7 [shape = 's32[1]{0}', space=sflag, size = 0x4, scoped, tag = 'scoped memory for tpu_custom_call.1']
    #allocation8 [shape = 'u8[512]{0}', space=vmem, size = 0x400, scoped, tag = 'output window, operand 0, single buffered']
    %11 = vsyncpa [#allocation4], 0
    %12 = vsyncpa [#allocation7], 0
    %13 = vsyncpa [#allocation5], 0
    // Predicated region
    $region2: #{tpu_custom_call.1} parent=1 // pred_check
      _
    $region3: #{tpu_custom_call.1} parent=1 // pred_check_branch
      %15 = sbr.rel (0) target = $region5
    $region4: #{tpu_custom_call.1} parent=1 // pred_region
      %s17 = ssub.s32 512, 512
      %18 = vsyncadd [#allocation4], %s17
      %s19 = sshll.u32 [#allocation3], 4
      %s20 = int_to_ptr.vmem [resolvable:$true] %s19
      %25 = dma.hbm_to_vmem [thread:$0]  %s0, 512, %s20, [#allocation4], 128, 128, 8
    $region5: #{tpu_custom_call.1} parent=1 // pred_fallthru
      _
    // Predicated region
    $region6: #{tpu_custom_call.1} parent=1 // pred_check
      _
    $region7: #{tpu_custom_call.1} parent=1 // pred_check_branch
      %27 = sbr.rel (0) target = $region9
    $region8: #{tpu_custom_call.1} parent=1 // pred_region
      %s29 = ssub.s32 512, 512
      %30 = vsyncadd [#allocation7], %s29
      %s31 = sshll.u32 [#allocation6], 4
      %s32 = int_to_ptr.vmem [resolvable:$true] %s31
      %37 = dma.hbm_to_vmem [thread:$0]  %s1, 512, %s32, [#allocation7], 128, 128, 8
    $region9: #{tpu_custom_call.1} parent=1 // pred_fallthru
      _
    // Predicated region
    $region10: #{tpu_custom_call.1} parent=1 // pred_check
      _
    $region11: #{tpu_custom_call.1} parent=1 // pred_check_branch
      %39 = sbr.rel (0) target = $region13
    $region12: #{tpu_custom_call.1} parent=1 // pred_region
      _
    $region13: #{tpu_custom_call.1} parent=1 // pred_fallthru
      _
    // Predicated region
    $region14: #{tpu_custom_call.1} parent=1 // pred_check
      _
    $region15: #{tpu_custom_call.1} parent=1 // pred_check_branch
      %41 = sbr.rel (0) target = $region17
    $region16: #{tpu_custom_call.1} parent=1 // pred_region
      _
    $region17: #{tpu_custom_call.1} parent=1 // pred_fallthru
      _
    // Predicated region
    $region18: #{tpu_custom_call.1} parent=1 // pred_check
      _
    $region19: #{tpu_custom_call.1} parent=1 // pred_check_branch
      %43 = sbr.rel (0) target = $region21
    $region20: #{tpu_custom_call.1} parent=1 // pred_region
      _
    $region21: #{tpu_custom_call.1} parent=1 // pred_fallthru
      _
    // Predicated region
    $region22: #{tpu_custom_call.1} parent=1 // pred_check
      _
    $region23: #{tpu_custom_call.1} parent=1 // pred_check_branch
      %45 = sbr.rel (0) target = $region25
    $region24: #{tpu_custom_call.1} parent=1 // pred_region
      %46 = dma.done [#allocation4], 512
    $region25: #{tpu_custom_call.1} parent=1 // pred_fallthru
      _
    // Predicated region
    $region26: #{tpu_custom_call.1} parent=1 // pred_check
      _
    $region27: #{tpu_custom_call.1} parent=1 // pred_check_branch
      %48 = sbr.rel (0) target = $region29
    $region28: #{tpu_custom_call.1} parent=1 // pred_region
      %49 = dma.done [#allocation7], 512
    $region29: #{tpu_custom_call.1} parent=1 // pred_fallthru
      _
    %v50 = vld [vmem:[#allocation3] sm:$0xff]
    %v51 = vld [vmem:[#allocation3 + $0x8] sm:$0xff]
    %v52 = vld [vmem:[#allocation3 + $0x10] sm:$0xff]
    %v53 = vld [vmem:[#allocation3 + $0x18] sm:$0xff]
    %v54 = vld [vmem:[#allocation6] sm:$0xff]
    %v55 = vld [vmem:[#allocation6 + $0x8] sm:$0xff]
    %v56 = vld [vmem:[#allocation6 + $0x10] sm:$0xff]
    %v57 = vld [vmem:[#allocation6 + $0x18] sm:$0xff]
    %v58 = vld [vmem:[%s2] sm:$0x1]
    %v60 = vlaneseq
    %v61 = vshrl.u32 %v60, 7
    %v62 = vsub.s32 0, %v61
    %v63 = vrot.slane %v58, %v62
    %vm65 = vcmask 261120
    %v67 = vsel %vm65, %v50, 0
    %v70 = vsel %vm65, %v51, 0
    %v73 = vsel %vm65, %v52, 0
    %v76 = vsel %vm65, %v53, 0
    %78 = vmatprep.subr.mxu0 0.0
    %79 = vmatpush1.msra.mxu0 0.0
    %80 = vmatprep.subr.mxu0 0.0
    %81 = vmatpush1.msra.mxu0 0.0
    %82 = vmatprep.subr.mxu0 0.0
    %83 = vmatpush1.msra.mxu0 0.0
    %84 = vmatprep.subr.mxu0 0.0
    %85 = vmatpush1.msra.mxu0 0.0
    %86 = vmatprep.subr.mxu0 0.0
    %87 = vmatpush1.msra.mxu0 0.0
    %88 = vmatprep.subr.mxu0 0.0
    %89 = vmatpush1.msra.mxu0 0.0
    %90 = vmatprep.subr.mxu0 0.0
    %91 = vmatpush1.msra.mxu0 0.0
    %92 = vmatprep.subr.mxu0 0.0
    %93 = vmatpush1.msra.mxu0 0.0
    %94 = vmatprep.subr.mxu0 0.0
    %95 = vmatpush1.msra.mxu0 0.0
    %96 = vmatprep.subr.mxu0 0.0
    %97 = vmatpush1.msra.mxu0 0.0
    %98 = vmatprep.subr.mxu0 0.0
    %99 = vmatpush1.msra.mxu0 0.0
    %100 = vmatprep.subr.mxu0 0.0
    %101 = vmatpush1.msra.mxu0 0.0
    %102 = vmatprep.subr.mxu0 0.0
    %103 = vmatpush1.msra.mxu0 %v57
    %104 = vmatprep.subr.mxu0 0.0
    %105 = vmatpush1.msra.mxu0 %v56
    %106 = vmatprep.subr.mxu0 0.0
    %107 = vmatpush1.msra.mxu0 %v55
    %108 = vmatprep.subr.mxu0 0.0
    %109 = vmatpush1.msra.mxu0 %v54
    %110 = vmatprep.subr.mxu0 0.0
    %111 = vmatpush2.msra.mxu0 0.0
    %112 = vmatprep.subr.mxu0 0.0
    %113 = vmatpush2.msra.mxu0 0.0
    %114 = vmatprep.subr.mxu0 0.0
    %115 = vmatpush2.msra.mxu0 0.0
    %116 = vmatprep.subr.mxu0 0.0
    %117 = vmatpush2.msra.mxu0 0.0
    %118 = vmatprep.subr.mxu0 0.0
    %119 = vmatpush2.msra.mxu0 0.0
    %120 = vmatprep.subr.mxu0 0.0
    %121 = vmatpush2.msra.mxu0 0.0
    %122 = vmatprep.subr.mxu0 0.0
    %123 = vmatpush2.msra.mxu0 0.0
    %124 = vmatprep.subr.mxu0 0.0
    %125 = vmatpush2.msra.mxu0 0.0
    %126 = vmatprep.subr.mxu0 0.0
    %127 = vmatpush2.msra.mxu0 0.0
    %128 = vmatprep.subr.mxu0 0.0
    %129 = vmatpush2.msra.mxu0 0.0
    %130 = vmatprep.subr.mxu0 0.0
    %131 = vmatpush2.msra.mxu0 0.0
    %132 = vmatprep.subr.mxu0 0.0
    %133 = vmatpush2.msra.mxu0 0.0
    %134 = vmatprep.subr.mxu0 0.0
    %135 = vmatpush2.msra.mxu0 0.0
    %136 = vmatprep.subr.mxu0 0.0
    %137 = vmatpush2.msra.mxu0 0.0
    %138 = vmatprep.subr.mxu0 0.0
    %139 = vmatpush2.msra.mxu0 0.0
    %140 = vmatprep.subr.mxu0 0.0
    %141 = vmatpush2.msra.mxu0 0.0
    %142 = vmatprep.mubr.f32.mxu0 0.0
    %143 = vmatmul.mubr.f32.gmra.mxu0 %v67
    %v144 = vpop.f32.mrf.mxu0
    %v145 = vadd.f32 %v63, %v144
    %v146 = vpop.f32.mrf.mxu0
    %147 = vmatprep.mubr.f32.mxu0 0.0
    %148 = vmatmul.mubr.f32.gmra.mxu0 %v70
    %v149 = vpop.f32.mrf.mxu0
    %v150 = vadd.f32 %v63, %v149
    %v151 = vpop.f32.mrf.mxu0
    %152 = vmatprep.mubr.f32.mxu0 0.0
    %153 = vmatmul.mubr.f32.gmra.mxu0 %v73
    %v154 = vpop.f32.mrf.mxu0
    %v155 = vadd.f32 %v63, %v154
    %v156 = vpop.f32.mrf.mxu0
    %157 = vmatprep.mubr.f32.mxu0 0.0
    %158 = vmatmul.mubr.f32.gmra.mxu0 %v76
    %v159 = vpop.f32.mrf.mxu0
    %v160 = vadd.f32 %v63, %v159
    %v161 = vpop.f32.mrf.mxu0
    %162 = vdwg.mxu0
    %v163 = vmax.f32 %v145, 0.0
    %v164 = vmax.f32 %v150, 0.0
    %v165 = vmax.f32 %v155, 0.0
    %v166 = vmax.f32 %v160, 0.0
    %v167 = vld [vmem:[%s3] sm:$0x1]
    %v169 = vlaneseq
    %v170 = vshrl.u32 %v169, 7
    %v171 = vsub.s32 0, %v170
    %v172 = vrot.slane %v167, %v171
    %v174 = vmul.f32 %v163, %v172
    %v175 = vmul.f32 %v164, %v172
    %v176 = vmul.f32 %v165, %v172
    %v177 = vmul.f32 %v166, %v172
    %178 = vadd.xlane.f32.xlu0 %v174
    %v179 = vpop.xlane.xlu0 %178
    %180 = vadd.xlane.f32.xlu0 %v175
    %v181 = vpop.xlane.xlu0 %180
    %182 = vadd.xlane.f32.xlu0 %v176
    %v183 = vpop.xlane.xlu0 %182
    %184 = vadd.xlane.f32.xlu0 %v177
    %v185 = vpop.xlane.xlu0 %184
    %s186 = sld [smem:[#allocation2]]
    %v187 = vstv %s186
    %v188 = vadd.f32 %v179, %v187
    %v189 = vadd.f32 %v181, %v187
    %v190 = vadd.f32 %v183, %v187
    %v191 = vadd.f32 %v185, %v187
    %v196 = vlaneseq
    %v197 = vand.u32 %v196, 127
    %v198 = vlaneseq
    %v199 = vshrl.u32 %v198, 7
    %v200 = vsub.s32 %v197, %v199
    %v201 = vrot.slane %v188, %v200
    %v202 = vadd.s32 %v197, 4294967288
    %v203 = vlaneseq
    %v204 = vshrl.u32 %v203, 7
    %v205 = vsub.s32 %v202, %v204
    %v206 = vrot.slane %v189, %v205
    %vm207 = vcmask 130112
    %v208 = vsel %vm207, %v206, %v201
    %v209 = vadd.s32 %v197, 4294967280
    %v210 = vlaneseq
    %v211 = vshrl.u32 %v210, 7
    %v212 = vsub.s32 %v209, %v211
    %v213 = vrot.slane %v190, %v212
    %vm214 = vcmask 195712
    %v215 = vsel %vm214, %v213, %v208
    %v216 = vadd.s32 %v197, 4294967272
    %v217 = vlaneseq
    %v218 = vshrl.u32 %v217, 7
    %v219 = vsub.s32 %v216, %v218
    %v220 = vrot.slane %v191, %v219
    %vm221 = vcmask 261312
    %v222 = vsel %vm221, %v220, %v215
    %vm224 = vcmask 253952
    %225 = vst.msk [vmem:[#allocation8] sm:$0x1] %vm224, %v222
    // Predicated region
    $region30: #{tpu_custom_call.1} parent=1 // pred_check
      _
    $region31: #{tpu_custom_call.1} parent=1 // pred_check_branch
      %227 = sbr.rel (0) target = $region33
    $region32: #{tpu_custom_call.1} parent=1 // pred_region
      %s229 = ssub.s32 16, 16
      %230 = vsyncadd [#allocation5], %s229
      %s232 = sshll.u32 [#allocation8], 4
      %s233 = int_to_ptr.vmem [resolvable:$true] %s232
      %235 = dma.vmem_to_hbm [thread:$0]  %s233, 16, %s5, [#allocation5]
    $region33: #{tpu_custom_call.1} parent=1 // pred_fallthru
      _
    // Predicated region
    $region34: #{tpu_custom_call.1} parent=1 // pred_check
      _
    $region35: #{tpu_custom_call.1} parent=1 // pred_check_branch
      %237 = sbr.rel (0) target = $region37
    $region36: #{tpu_custom_call.1} parent=1 // pred_region
      %238 = dma.done [#allocation5], 16
    $region37: #{tpu_custom_call.1} parent=1 // pred_fallthru
      _
    %239 = vsyncpa [#allocation4], 1
    %240 = vsyncpa [#allocation7], 1
    %241 = vsyncpa [#allocation5], 1

</llo_original>
